<compile_context>
chip_gen: v6e
topology: v6e:2x2x1
jax: 0.10.0
libtpu: 0.0.40
codegen_flags: <defaults>
</compile_context>

<pallas_src>
import jax
import jax.numpy as jnp
from jax.experimental import pallas as pl
from jax.experimental.pallas import tpu as pltpu

# Below this size, custom-call launch + DMA-descriptor setup dwarfs the copy.
_SMALL_FAST_PATH_BYTES = 1 << 20          # 1 MiB
# Above this size, split the HBM->HBM copy into concurrent chunk DMAs.
_CHUNKED_DMA_BYTES = 512 << 20            # 512 MiB
_DEFAULT_NUM_CHUNKS = 4


# ---------------------------------------------------------------------------
# Path 1: true identity — the actual optimum for this module.
# ---------------------------------------------------------------------------
def identity_forward(x):
    """Identity.forward(x) == x — no kernel, no copy."""
    return x


# ---------------------------------------------------------------------------
# Path 2: aliased no-op Pallas kernel (output buffer IS the input buffer).
# ---------------------------------------------------------------------------
def _identity_alias_kernel(x_hbm, o_hbm):
    # Output aliases the input (input_output_aliases={0: 0}); nothing to do.
    del x_hbm, o_hbm


def identity_alias_pallas(x):
    """Identity as a Pallas call with ZERO HBM traffic.

    The output aliases the input buffer, so the kernel body is a no-op.  Do not
    use this where the caller relies on a physically distinct buffer (e.g. the
    result is later mutated in place via another kernel's aliasing).
    """
    return pl.pallas_call(
        _identity_alias_kernel,
        out_shape=jax.ShapeDtypeStruct(x.shape, x.dtype),
        in_specs=[pl.BlockSpec(memory_space=pl.ANY)],
        out_specs=pl.BlockSpec(memory_space=pl.ANY),
        input_output_aliases={0: 0},
    )(x)


# ---------------------------------------------------------------------------
# Path 3: genuinely distinct materialized copy — direct HBM->HBM DMA.
# ---------------------------------------------------------------------------
def _identity_copy_single_kernel(x_hbm, o_hbm, sem):
    # One whole-array HBM->HBM DMA: the DMA engine streams at full HBM
    # bandwidth with no VMEM bounce and no per-tile grid overhead.
    cp = pltpu.make_async_copy(x_hbm, o_hbm, sem)
    cp.start()
    cp.wait()


def _make_chunked_copy_kernel(bounds):
    # `bounds` is a static tuple of (start, size) slices along the leading dim.
    # All K DMAs are started before any wait, so they run concurrently on
    # multiple DMA queues and hide per-descriptor latency on huge copies.
    # TODO(synk): on v7x, split chunk-descriptor issue across the 2 TensorCores
    #             (grid=(2,) with dimension_semantics=("parallel",)) if a single
    #             core's descriptor-issue rate ever becomes the limiter.
    def kernel(x_hbm, o_hbm, sems):
        copies = []
        for k, (start, size) in enumerate(bounds):
            cp = pltpu.make_async_copy(
                x_hbm.at[pl.ds(start, size)],
                o_hbm.at[pl.ds(start, size)],
                sems.at[k],
            )
            cp.start()
            copies.append(cp)
        for cp in copies:
            cp.wait()

    return kernel


def identity_copy_pallas(x, *, num_chunks=None):
    """Identity that materializes a distinct output buffer via HBM->HBM DMA.

    Note: if the copy does not have to live inside Pallas, letting XLA emit it
    (plain jnp-level copy) is usually better — a pallas_call is a fusion /
    copy-elision barrier.  This path exists for when the copy is required here.
    """
    nbytes = int(x.size) * int(x.dtype.itemsize)
    if x.size == 0:
        return jnp.copy(x)

    if num_chunks is None:
        num_chunks = _DEFAULT_NUM_CHUNKS if nbytes >= _CHUNKED_DMA_BYTES else 1
    k = 1
    if x.ndim >= 1:
        k = max(1, min(int(num_chunks), int(x.shape[0])))

    # Advisory hint: pure memory op of known size, so XLA can overlap
    # surrounding compute / collectives with the copy.
    cost = pl.CostEstimate(flops=0, transcendentals=0, bytes_accessed=2 * nbytes)

    if k <= 1:
        return pl.pallas_call(
            _identity_copy_single_kernel,
            out_shape=jax.ShapeDtypeStruct(x.shape, x.dtype),
            in_specs=[pl.BlockSpec(memory_space=pl.ANY)],
            out_specs=pl.BlockSpec(memory_space=pl.ANY),
            scratch_shapes=[pltpu.SemaphoreType.DMA(())],
            cost_estimate=cost,
        )(x)

    # Static chunk boundaries along the leading dimension (uneven sizes OK).
    lead = int(x.shape[0])
    base, rem = divmod(lead, k)
    bounds, start = [], 0
    for i in range(k):
        size = base + (1 if i < rem else 0)
        bounds.append((start, size))
        start += size

    return pl.pallas_call(
        _make_chunked_copy_kernel(tuple(bounds)),
        out_shape=jax.ShapeDtypeStruct(x.shape, x.dtype),
        in_specs=[pl.BlockSpec(memory_space=pl.ANY)],
        out_specs=pl.BlockSpec(memory_space=pl.ANY),
        scratch_shapes=[pltpu.SemaphoreType.DMA((k,))],
        cost_estimate=cost,
    )(x)


# ---------------------------------------------------------------------------
# Dispatcher incorporating all review feedback.
# ---------------------------------------------------------------------------
def identity_forward_pallas(x, *, require_distinct_buffer=False):
    nbytes = int(x.size) * int(x.dtype.itemsize)
    if not require_distinct_buffer:
        if nbytes < _SMALL_FAST_PATH_BYTES:
            return x                      # launch overhead >> any benefit
        return identity_alias_pallas(x)   # zero HBM traffic, output aliases input
    return identity_copy_pallas(x)        # distinct buffer: HBM->HBM DMA


if __name__ == "__main__":
    key = jax.random.PRNGKey(0)
    # Small NCHW-like input consistent with the (shape-agnostic) forward.
    x = jax.random.normal(key, (2, 4, 16, 16), dtype=jnp.float32)

    # 1. Optimal path: no kernel at all.
    y_fast = identity_forward(x)
    assert y_fast is x

    # 2. Dispatcher: 8 KiB input -> small-tensor fast path (returns x).
    y_disp = identity_forward_pallas(x)
    assert y_disp is x

    # 3. Aliased no-op Pallas kernel (zero HBM traffic), exercised explicitly.
    y_alias = jax.block_until_ready(identity_alias_pallas(x))
    assert y_alias.shape == x.shape and y_alias.dtype == x.dtype
    assert bool(jnp.all(y_alias == x))

    # 4. Materialized-copy path: single HBM->HBM DMA descriptor.
    y_copy = jax.block_until_ready(identity_copy_pallas(x))
    assert y_copy.shape == x.shape and y_copy.dtype == x.dtype
    assert bool(jnp.all(y_copy == x))

    # 5. Chunked concurrent-DMA variant (forced with 2 chunks here so the
    #    large-tensor code path is also compiled and validated).
    y_chunk = jax.block_until_ready(identity_copy_pallas(x, num_chunks=2))
    assert y_chunk.shape == x.shape and y_chunk.dtype == x.dtype
    assert bool(jnp.all(y_chunk == x))

    print("KERNEL_OK")
</pallas_src>

<mosaic_0001>
module attributes {stable_mosaic.version = 11 : i64} {
  func.func @_identity_alias_kernel(%arg0: memref<2x4x16x16xf32, #tpu.memory_space<any>>, %arg1: memref<2x4x16x16xf32, #tpu.memory_space<any>>) attributes {dimension_semantics = [], scalar_prefetch = 0 : i64, scratch_operands = 0 : i64, tpu.core_type = #tpu.core_type<tc>} {
    return
  }
}

</mosaic_0001>

<llo_original>
// kernel: tpu_custom_call.1
$region0: #{tpu_custom_call.1}
  #allocation0 [shape = 'u32[]', space=smem, size = 0x4, offset = 0x4, fixed_abs, tag = 'smem constant byte address 0x4 - core index']
  #allocation1 [shape = 'u32[144,128]{1,0:T(1,128)}', space=vmem, size = 0x12000, scoped, tag = 'internal scratch']
  %s0 = inlined_call_operand.hbm [shape: f32[2,4,16,16], index: 0, kind: input, shape index: {}, may-alias: {0,1}]
  %s1 = inlined_call_operand.hbm [shape: f32[2,4,16,16], index: 1, kind: output, shape index: {}, may-alias: {0,1}]
  %s2 = sld [smem:[#allocation0]]
  $region2: #{tpu_custom_call.1} parent=0
    _
  %s4 = ssub.s32 1, %s2
  %s5 = scalar_select 0, %s4, %s2

</llo_original>
